<compile_context>
chip_gen: v5e
topology: v5e:2x2
jax: 0.10.0
libtpu: 0.0.40
codegen_flags: <defaults>
</compile_context>

<pallas_src>
import functools

import jax
import jax.numpy as jnp
from jax.experimental import pallas as pl
from jax.experimental.pallas import tpu as pltpu


def _ce_label_smooth_kernel(x_ref, t_ref, out_ref, *,
                            num_classes, epsilon, n_total, tile_n,
                            tiles_per_chunk, needs_mask):
    tj = pl.program_id(1)            # tile index within this chunk (reduction axis)

    @pl.when(tj == 0)
    def _init():
        out_ref[...] = jnp.zeros_like(out_ref)

    x = x_ref[...].astype(jnp.float32)                                 # (tn, C)
    tn, c = x.shape

    # Numerically stable per-row log-sum-exp (class axis = lane axis).
    m = jnp.max(x, axis=1, keepdims=True)                              # (tn, 1)
    lse = jnp.log(jnp.sum(jnp.exp(x - m), axis=1, keepdims=True))      # (tn, 1)

    # Fused smoothed cross term on the pre-shift logits:
    #   sum_j smooth_w_ij * x_ij,  smooth_w_ij = eps/C + (1-eps)*[j == t_i]
    col_ids = jax.lax.broadcasted_iota(jnp.int32, (tn, c), 1)
    w_uni = jnp.float32(epsilon / num_classes)
    w_hit = jnp.float32(1.0 - epsilon + epsilon / num_classes)
    smooth_w = jnp.where(col_ids == t_ref[...], w_hit, w_uni)          # (tn, C)
    weighted = jnp.sum(smooth_w * x, axis=1, keepdims=True)            # (tn, 1)

    # Per-row label-smoothed NLL (smoothing weights sum to exactly 1):
    loss_rows = (m + lse) - weighted                                   # (tn, 1)

    if needs_mask:
        # Rows past the batch end (ragged edge tile / clamped phantom tile)
        # contribute exactly zero.  Garbage/NaN in those rows cannot leak into
        # valid rows because every reduction above is along the class axis.
        global_tile = pl.program_id(0) * tiles_per_chunk + tj
        row_ids = (jax.lax.broadcasted_iota(jnp.int32, (tn, 1), 0)
                   + global_tile * tile_n)
        loss_rows = jnp.where(row_ids < n_total, loss_rows, 0.0)

    out_ref[...] += jnp.sum(loss_rows, keepdims=True)                  # (1, 1)


def _vmem_capacity_bytes():
    """Physical VMEM per TensorCore; conservative (v7x) default if query fails."""
    try:
        info = pltpu.get_tpu_info()
        for attr in ("vmem_capacity_bytes", "vmem_size_bytes", "vmem_bytes"):
            cap = getattr(info, attr, None)
            if cap:
                return int(cap)
    except Exception:
        pass
    return 64 * 1024 * 1024


def _pick_tile_n(n, c, itemsize, budget_bytes):
    """Largest row tile (multiple of 16, <= 4096) whose per-step VMEM use —
    double-buffered logits stream + ~5 f32 compute slabs + lane-padded int32
    targets block — stays within budget_bytes; full batch if it already fits."""
    per_row = (2 * itemsize * c          # double-buffered logits stream
               + 5 * 4 * c               # f32 in-kernel temporaries
               + 2 * 4 * 128)            # (tile_n,1) int32 targets padded to 128 lanes
    tile = budget_bytes // max(per_row, 1)
    tile = int(max(16, min(4096, (tile // 16) * 16)))
    if n <= tile:
        return n                         # block equals full array dim -> legal tile
    return tile                          # multiple of 16 -> legal; edge rows masked


def cross_entropy_label_smooth(inputs, targets, num_classes, epsilon, *, tile_n=None):
    """inputs: (N, C) float32/bfloat16 logits; targets: (N,) int32 class ids."""
    n, c = inputs.shape
    assert c == num_classes
    targets_2d = targets.astype(jnp.int32).reshape(n, 1)

    vmem_cap = _vmem_capacity_bytes()
    # Scoped limit: ~3/4 of physical, capped at 96 MiB (v7x -> 48 MiB, v5e/v6e -> 96).
    vmem_limit = max(32 * 1024 * 1024, min((vmem_cap * 3) // 4, 96 * 1024 * 1024))

    itemsize = jnp.dtype(inputs.dtype).itemsize
    if tile_n is None:
        tile_n = _pick_tile_n(n, c, itemsize, vmem_limit // 2)
    tile_n = min(int(tile_n), n)

    num_tiles = -(-n // tile_n)
    num_chunks = 2 if num_tiles >= 2 else 1        # one partial per TensorCore on v7x
    tiles_per_chunk = -(-num_tiles // num_chunks)
    needs_mask = (num_chunks * tiles_per_chunk * tile_n) != n

    def block_index(i, j):
        # Clamp phantom tiles (grid covers ceil-divided work) onto the last
        # real block so the DMA never reads out of bounds; the kernel masks
        # their rows to zero via the global row-id compare.
        t = i * tiles_per_chunk + j
        return (jnp.minimum(t, num_tiles - 1), 0)

    kernel = functools.partial(
        _ce_label_smooth_kernel,
        num_classes=num_classes,
        epsilon=float(epsilon),
        n_total=n,
        tile_n=tile_n,
        tiles_per_chunk=tiles_per_chunk,
        needs_mask=needs_mask,
    )

    cost = pl.CostEstimate(
        flops=6 * n * c,
        transcendentals=n * c + n,
        bytes_accessed=itemsize * n * c + 4 * n + 4 * num_chunks,
    )

    partials = pl.pallas_call(
        kernel,
        out_shape=jax.ShapeDtypeStruct((num_chunks, 1), jnp.float32),
        grid=(num_chunks, tiles_per_chunk),
        in_specs=[
            pl.BlockSpec((tile_n, c), block_index),    # logits row tile
            pl.BlockSpec((tile_n, 1), block_index),    # target ids for the tile
        ],
        out_specs=pl.BlockSpec((1, 1), lambda i, j: (i, 0)),  # per-chunk partial
        compiler_params=pltpu.CompilerParams(
            dimension_semantics=("parallel", "arbitrary"),
            vmem_limit_bytes=vmem_limit,
        ),
        cost_estimate=cost,
    )(inputs, targets_2d)

    return jnp.sum(partials) * jnp.float32(1.0 / n)


def _reference(inputs, targets, num_classes, epsilon):
    log_probs = jax.nn.log_softmax(inputs.astype(jnp.float32), axis=1)
    one_hot = jax.nn.one_hot(targets, num_classes, dtype=jnp.float32)
    smooth = (1.0 - epsilon) * one_hot + epsilon / num_classes
    return (-smooth * log_probs).mean(0).sum()


if __name__ == "__main__":
    key = jax.random.PRNGKey(0)
    k1, k2, k3, k4 = jax.random.split(key, 4)

    # Test 1: small shape from the module spec (single tile, no masking,
    # auto tile size covers the whole batch).
    num_classes, epsilon, batch = 16, 0.1, 8
    x1 = jax.random.normal(k1, (batch, num_classes), dtype=jnp.float32)
    t1 = jax.random.randint(k2, (batch,), 0, num_classes, dtype=jnp.int32)
    loss1 = cross_entropy_label_smooth(x1, t1, num_classes, epsilon)
    jax.block_until_ready(loss1)
    ref1 = _reference(x1, t1, num_classes, epsilon)
    assert jnp.allclose(loss1, ref1, rtol=1e-4, atol=1e-5), (loss1, ref1)

    # Test 2: forced small tile to exercise the multi-tile / two-chunk path:
    # ragged edge tile, clamped phantom tile, per-chunk partials, row masking.
    n2, c2, eps2 = 1029, 256, 0.2
    x2 = jax.random.normal(k3, (n2, c2), dtype=jnp.float32)
    t2 = jax.random.randint(k4, (n2,), 0, c2, dtype=jnp.int32)
    loss2 = cross_entropy_label_smooth(x2, t2, c2, eps2, tile_n=256)
    jax.block_until_ready(loss2)
    ref2 = _reference(x2, t2, c2, eps2)
    assert jnp.allclose(loss2, ref2, rtol=1e-4, atol=1e-5), (loss2, ref2)

    print("KERNEL_OK")
</pallas_src>

<mosaic_0001>
module attributes {stable_mosaic.version = 11 : i64} {
  func.func @_ce_label_smooth_kernel(%arg0: i32, %arg1: i32, %arg2: memref<8x16xf32, #tpu.memory_space<vmem>>, %arg3: memref<8x1xi32, #tpu.memory_space<vmem>>, %arg4: memref<1x1xf32, #tpu.memory_space<vmem>>) attributes {dimension_semantics = [#tpu.dimension_semantics<parallel>, #tpu.dimension_semantics<arbitrary>], iteration_bounds = array<i64: 1, 1>, scalar_prefetch = 0 : i64, scratch_operands = 0 : i64, tpu.core_type = #tpu.core_type<tc>, window_params = [{transform_indices = @transform_0, window_bounds = array<i64: 8, 16>}, {transform_indices = @transform_1, window_bounds = array<i64: 8, 1>}, {transform_indices = @transform_2, window_bounds = array<i64: 1, 1>}]} {
    %c0_i32 = arith.constant 0 : i32
    %0 = arith.cmpi eq, %arg1, %c0_i32 : i32
    %1 = arith.extui %0 : i1 to i32
    %c0_i32_0 = arith.constant 0 : i32
    %2 = arith.cmpi ne, %1, %c0_i32_0 : i32
    scf.if %2 {
      %cst_13 = arith.constant 0.000000e+00 : f32
      %32 = vector.broadcast %cst_13 : f32 to vector<1x1xf32>
      %c0_14 = arith.constant 0 : index
      %c0_15 = arith.constant 0 : index
      %33 = vector.load %arg4[%c0_14, %c0_15] : memref<1x1xf32, #tpu.memory_space<vmem>>, vector<1x1xf32>
      tpu.vector_store %arg4[%c0_14, %c0_15], %32 {strides = array<i32>} : memref<1x1xf32, #tpu.memory_space<vmem>>, vector<1x1xf32>,
    } else {
    }
    %c0 = arith.constant 0 : index
    %c0_1 = arith.constant 0 : index
    %3 = vector.load %arg2[%c0, %c0_1] : memref<8x16xf32, #tpu.memory_space<vmem>>, vector<8x16xf32>
    %cst = arith.constant dense<0xFF800000> : vector<8xf32>
    %4 = vector.multi_reduction <maximumf>, %3, %cst [1] : vector<8x16xf32> to vector<8xf32>
    %5 = vector.shape_cast %4 : vector<8xf32> to vector<8x1xf32>
    %6 = vector.broadcast %5 : vector<8x1xf32> to vector<8x16xf32>
    %7 = arith.subf %3, %6 : vector<8x16xf32>
    %8 = math.exp %7 : vector<8x16xf32>
    %cst_2 = arith.constant dense<0.000000e+00> : vector<8xf32>
    %9 = vector.multi_reduction <add>, %8, %cst_2 [1] : vector<8x16xf32> to vector<8xf32>
    %10 = vector.shape_cast %9 : vector<8xf32> to vector<8x1xf32>
    %11 = math.log %10 : vector<8x1xf32>
    %12 = tpu.iota {dimensions = array<i32: 1>} : vector<8x16xi32>
    %c0_3 = arith.constant 0 : index
    %c0_4 = arith.constant 0 : index
    %13 = vector.load %arg3[%c0_3, %c0_4] : memref<8x1xi32, #tpu.memory_space<vmem>>, vector<8x1xi32>
    %14 = vector.broadcast %13 : vector<8x1xi32> to vector<8x16xi32>
    %15 = arith.cmpi eq, %12, %14 : vector<8x16xi32>
    %cst_5 = arith.constant 9.062500e-01 : f32
    %cst_6 = arith.constant 6.250000e-03 : f32
    %16 = vector.broadcast %cst_5 : f32 to vector<8x16xf32>
    %17 = vector.broadcast %cst_6 : f32 to vector<8x16xf32>
    %18 = arith.select %15, %16, %17 : vector<8x16xi1>, vector<8x16xf32>
    %19 = arith.mulf %18, %3 : vector<8x16xf32>
    %cst_7 = arith.constant dense<0.000000e+00> : vector<8xf32>
    %20 = vector.multi_reduction <add>, %19, %cst_7 [1] : vector<8x16xf32> to vector<8xf32>
    %21 = vector.shape_cast %20 : vector<8xf32> to vector<8x1xf32>
    %22 = arith.addf %5, %11 : vector<8x1xf32>
    %23 = arith.subf %22, %21 : vector<8x1xf32>
    %c0_8 = arith.constant 0 : index
    %c0_9 = arith.constant 0 : index
    %24 = vector.load %arg4[%c0_8, %c0_9] : memref<1x1xf32, #tpu.memory_space<vmem>>, vector<1x1xf32>
    %25 = vector.shape_cast %23 : vector<8x1xf32> to vector<1x8x1xf32>
    %cst_10 = arith.constant dense<0.000000e+00> : vector<1xf32>
    %26 = vector.multi_reduction <add>, %25, %cst_10 [1, 2] : vector<1x8x1xf32> to vector<1xf32>
    %27 = vector.shape_cast %26 : vector<1xf32> to vector<1x1x1xf32>
    %28 = vector.extract %27[0, 0, 0] : f32 from vector<1x1x1xf32>
    %29 = vector.broadcast %28 : f32 to vector<1x1xf32>
    %30 = arith.addf %24, %29 : vector<1x1xf32>
    %c0_11 = arith.constant 0 : index
    %c0_12 = arith.constant 0 : index
    %31 = vector.load %arg4[%c0_11, %c0_12] : memref<1x1xf32, #tpu.memory_space<vmem>>, vector<1x1xf32>
    tpu.vector_store %arg4[%c0_11, %c0_12], %30 {strides = array<i32>} : memref<1x1xf32, #tpu.memory_space<vmem>>, vector<1x1xf32>,
    return
  }
  func.func @transform_0(%arg0: i32, %arg1: i32) -> (i32, i32) {
    %c1_i32 = arith.constant 1 : i32
    %0 = arith.muli %arg0, %c1_i32 : i32
    %1 = arith.addi %0, %arg1 : i32
    %c0_i32 = arith.constant 0 : i32
    %2 = arith.minsi %1, %c0_i32 : i32
    %c0_i32_0 = arith.constant 0 : i32
    %c0_i32_1 = arith.constant 0 : i32
    return %2, %c0_i32_0 : i32, i32
  }
  func.func @transform_1(%arg0: i32, %arg1: i32) -> (i32, i32) {
    %c1_i32 = arith.constant 1 : i32
    %0 = arith.muli %arg0, %c1_i32 : i32
    %1 = arith.addi %0, %arg1 : i32
    %c0_i32 = arith.constant 0 : i32
    %2 = arith.minsi %1, %c0_i32 : i32
    %c0_i32_0 = arith.constant 0 : i32
    %c0_i32_1 = arith.constant 0 : i32
    return %2, %c0_i32_0 : i32, i32
  }
  func.func @transform_2(%arg0: i32, %arg1: i32) -> (i32, i32) {
    %c0_i32 = arith.constant 0 : i32
    %c0_i32_0 = arith.constant 0 : i32
    return %arg0, %c0_i32 : i32, i32
  }
}

</mosaic_0001>

<llo_original>
// kernel: tpu_custom_call.1
$region0: #{tpu_custom_call.1}
  #allocation0 [shape = 'u32[]', space=smem, size = 0x4, offset = 0x4, fixed_abs, tag = 'smem constant byte address 0x4 - core index']
  #allocation1 [shape = 'u32[72,128]{1,0:T(1,128)}', space=vmem, size = 0x9000, scoped, tag = 'internal scratch']
  %s0 = inlined_call_operand.vmem [shape: f32[8,16], index: 0, kind: input, shape index: {}]
  %s1 = inlined_call_operand.vmem [shape: s32[8,1], index: 1, kind: input, shape index: {}]
  %s2 = inlined_call_operand.hbm [shape: f32[1,1], index: 2, kind: output, shape index: {}]
  %s3 = sld [smem:[#allocation0]]
  $region22: #{tpu_custom_call.1} parent=0
    _
  %s5 = ssub.s32 1, %s3
  %s6 = scalar_select 0, %s5, %s3
  $region1: #{tpu_custom_call.1} parent=0
    #allocation2 [shape = 'u8[512]{0}', space=vmem, size = 0x400, scoped, tag = 'output window, operand 0, single buffered']
    #allocation3 [shape = 's32[1]{0}', space=sflag, size = 0x4, scoped, tag = 'scoped memory for tpu_custom_call.1']
    %7 = vsyncpa [#allocation3], 0
    // Predicated region
    $region2: #{tpu_custom_call.1} parent=1 // pred_check
      _
    $region3: #{tpu_custom_call.1} parent=1 // pred_check_branch
      %9 = sbr.rel (0) target = $region5
    $region4: #{tpu_custom_call.1} parent=1 // pred_region
      %s10 = sadd.s32 0, 0
      %p11 = scmp.lt.s32.totalorder %s10, 0
      %s12 = scalar_select %p11, %s10, 0
      %p13 = scmp.lt.s32.totalorder %s12, 0
      %s14 = scalar_select %p13, %s12, 0
      %s15 = smul.addr %s14, 8
      %s16 = scalar_lea.vmem %s0, %s15
      %s17 = sadd.s32 0, 0
      %p18 = scmp.lt.s32.totalorder %s17, 0
      %s19 = scalar_select %p18, %s17, 0
    $region5: #{tpu_custom_call.1} parent=1 // pred_fallthru
      _
    // Predicated region
    $region6: #{tpu_custom_call.1} parent=1 // pred_check
      _
    $region7: #{tpu_custom_call.1} parent=1 // pred_check_branch
      %21 = sbr.rel (0) target = $region9
    $region8: #{tpu_custom_call.1} parent=1 // pred_region
      %s22 = sadd.s32 0, 0
      %p23 = scmp.lt.s32.totalorder %s22, 0
      %s24 = scalar_select %p23, %s22, 0
      %p25 = scmp.lt.s32.totalorder %s24, 0
      %s26 = scalar_select %p25, %s24, 0
      %s27 = smul.addr %s26, 8
      %s28 = scalar_lea.vmem %s1, %s27
      %s29 = sadd.s32 0, 0
      %p30 = scmp.lt.s32.totalorder %s29, 0
      %s31 = scalar_select %p30, %s29, 0
    $region9: #{tpu_custom_call.1} parent=1 // pred_fallthru
      _
    %s32 = sadd.s32 0, 0
    %p33 = scmp.lt.s32.totalorder %s32, 0
    %s34 = scalar_select %p33, %s32, 0
    %p35 = scmp.lt.s32.totalorder %s34, 0
    %s36 = scalar_select %p35, %s34, 0
    %s37 = smul.addr %s36, 8
    %s38 = scalar_lea.vmem %s0, %s37
    %s39 = sadd.s32 0, 0
    %p40 = scmp.lt.s32.totalorder %s39, 0
    %s41 = scalar_select %p40, %s39, 0
    %p42 = scmp.lt.s32.totalorder %s41, 0
    %s43 = scalar_select %p42, %s41, 0
    %s44 = smul.addr %s43, 8
    %s45 = scalar_lea.vmem %s1, %s44
    %s46 = sadd.s32 0, 0
    %p47 = scmp.lt.s32.totalorder %s46, 0
    %s48 = scalar_select %p47, %s46, 0
    %p49 = scmp.lt.s32.totalorder %s48, 0
    %s50 = scalar_select %p49, %s48, 0
    %s51 = smul.addr %s50, 8
    %s52 = scalar_lea.vmem %s0, %s51
    %s53 = sadd.s32 0, 0
    %p54 = scmp.lt.s32.totalorder %s53, 0
    %s55 = scalar_select %p54, %s53, 0
    %s56 = sadd.s32 0, 0
    %p57 = scmp.lt.s32.totalorder %s56, 0
    %s58 = scalar_select %p57, %s56, 0
    %p59 = scmp.lt.s32.totalorder %s58, 0
    %s60 = scalar_select %p59, %s58, 0
    %s61 = smul.addr %s60, 8
    %s62 = scalar_lea.vmem %s1, %s61
    %s63 = sadd.s32 0, 0
    %p64 = scmp.lt.s32.totalorder %s63, 0
    %s65 = scalar_select %p64, %s63, 0
    %p66 = scmp.eq.s32.totalorder 0, 0
    // Predicated region
    $region10: #{tpu_custom_call.1} parent=1 // pred_check
      %p67 = pneg %p66
    $region11: #{tpu_custom_call.1} parent=1 // pred_check_branch
      %69 = sbr.rel (%p67) target = $region13
    $region12: #{tpu_custom_call.1} parent=1 // pred_region
      %vm70 = vcmask 0
      %71 = vst.msk [vmem:[#allocation2] sm:$0x1] %vm70, 0.0
    $region13: #{tpu_custom_call.1} parent=1 // pred_fallthru
      _
    %v72 = vld [vmem:[%s52] sm:$0xff]
    %vm73 = vcmask 130048
    %v74 = vsel %vm73, %v72, -inf
    %75 = vmax.xlane.f32.xlu0 %v74
    %v76 = vpop.xlane.xlu0 %75
    %v77 = vsub.f32 %v72, %v76
    %v78 = vmul.f32 %v77, 1.442695
    %v79 = vpow.pop %v78
    %v80 = vsel %vm73, %v79, 0.0
    %81 = vadd.xlane.f32.xlu0 %v80
    %v82 = vpop.xlane.xlu0 %81
    %v83 = vlog2.pop %v82
    %v84 = vmul.f32 %v83, 0.6931472
    %v85 = vlaneseq
    %v86 = vand.u32 %v85, 127
    %v87 = vld [vmem:[%s62] sm:$0xff]
    %88 = vset.pattern.permute.xlu0 0
    %89 = vperm.xlu0 %88, %v87
    %v90 = vpop.permute.xlu0 %89
    %vm91 = vcmp.eq.s32.totalorder %v86, %v90
    %v92 = vsel %vm91, 0.90625, 0.00625
    %v93 = vmul.f32 %v92, %v72
    %v94 = vsel %vm73, %v93, 0.0
    %95 = vadd.xlane.f32.xlu0 %v94
    %v96 = vpop.xlane.xlu0 %95
    %v97 = vadd.f32 %v76, %v84
    %v98 = vsub.f32 %v97, %v96
    %v99 = vld [vmem:[#allocation2] sm:$0x1]
    %vm100 = vcmask 7168
    %v101 = vsel %vm100, %v98, 0.0
    %102 = vadd.xlane.f32.xlu0 %v101
    %v103 = vpop.xlane.xlu0 %102
    %v104 = vrot.slane %v103, 4
    %v105 = vadd.f32 %v103, %v104
    %v106 = vrot.slane %v105, 2
    %v107 = vadd.f32 %v105, %v106
    %v108 = vrot.slane %v107, 1
    %v109 = vadd.f32 %v107, %v108
    %s110 = vtos %v109
    %v111 = vstv %s110
    %v112 = vadd.f32 %v99, %v111
    %vm113 = vcmask 0
    %114 = vst.msk [vmem:[#allocation2] sm:$0x1] %vm113, %v112
    // Predicated region
    $region14: #{tpu_custom_call.1} parent=1 // pred_check
      _
    $region15: #{tpu_custom_call.1} parent=1 // pred_check_branch
      %116 = sbr.rel (0) target = $region17
    $region16: #{tpu_custom_call.1} parent=1 // pred_region
      %118 = vsyncadd [#allocation3], 0
      %s120 = sshll.u32 [#allocation2], 4
      %s121 = int_to_ptr.vmem [resolvable:$true] %s120
      %s122 = sshll.u32 %s2, 4
      %s123 = int_to_ptr.hbm [resolvable:$true] %s122
      %125 = dma.vmem_to_hbm [thread:$0]  %s121, 16, %s123, [#allocation3]
    $region17: #{tpu_custom_call.1} parent=1 // pred_fallthru
      _
    // Predicated region
    $region18: #{tpu_custom_call.1} parent=1 // pred_check
      _
    $region19: #{tpu_custom_call.1} parent=1 // pred_check_branch
      %127 = sbr.rel (0) target = $region21
    $region20: #{tpu_custom_call.1} parent=1 // pred_region
      %129 = dma.done [#allocation3], 16
    $region21: #{tpu_custom_call.1} parent=1 // pred_fallthru
      _
    %130 = vsyncpa [#allocation3], 1

</llo_original>
